<compile_context>
chip_gen: v7x
topology: tpu7x:2x2x1
jax: 0.10.0
libtpu: 0.0.40
codegen_flags: <defaults>
</compile_context>

<pallas_src>
import jax
import jax.numpy as jnp
from jax.experimental import pallas as pl
from jax.experimental.pallas import tpu as pltpu

_LANES = 128
_MAX_BLOCK_ROWS = 512  # (512, 128) f32 block = 256 KiB -> VMEM-safe double-buffered


def _hash_u32(x):
    """lowbias32 integer hash (uint32 -> uint32), vectorized."""
    x = x ^ (x >> 16)
    x = x * jnp.uint32(0x7FEB352D)
    x = x ^ (x >> 15)
    x = x * jnp.uint32(0x846CA68B)
    x = x ^ (x >> 16)
    return x


def _inv_norm_cdf(p):
    """Acklam rational approximation of the inverse normal CDF (vectorized).

    Uses only mul/add/div/log/sqrt/where -> lowers cleanly on TPU (VPU + EUP).
    Accurate to ~1e-7 over p in (0, 1).
    """
    a1, a2, a3 = -3.969683028665376e+01, 2.209460984245205e+02, -2.759285104469687e+02
    a4, a5, a6 = 1.383577518672690e+02, -3.066479806614716e+01, 2.506628277459239e+00
    b1, b2, b3 = -5.447609879822406e+01, 1.615858368580409e+02, -1.556989798598866e+02
    b4, b5 = 6.680131188771972e+01, -1.328068155288572e+01
    c1, c2, c3 = -7.784894002430293e-03, -3.223964580411365e-01, -2.400758277161838e+00
    c4, c5, c6 = -2.549732539343734e+00, 4.374664141464968e+00, 2.938163982698783e+00
    d1, d2, d3 = 7.784695709041462e-03, 3.224671290700398e-01, 2.445134137142996e+00
    d4 = 3.754408661907416e+00
    p_low = 0.02425
    p_high = 1.0 - p_low

    # Central region.
    q = p - 0.5
    r = q * q
    x_c = ((((((a1 * r + a2) * r + a3) * r + a4) * r + a5) * r + a6) * q /
           (((((b1 * r + b2) * r + b3) * r + b4) * r + b5) * r + 1.0))

    # Lower tail (p < p_low).  Guard the log argument; p is never 0 by
    # construction but the untaken branch must still be finite.
    ql = jnp.sqrt(-2.0 * jnp.log(jnp.maximum(p, 1e-30)))
    x_l = ((((((c1 * ql + c2) * ql + c3) * ql + c4) * ql + c5) * ql + c6) /
           ((((d1 * ql + d2) * ql + d3) * ql + d4) * ql + 1.0))

    # Upper tail (p > p_high).
    qu = jnp.sqrt(-2.0 * jnp.log(jnp.maximum(1.0 - p, 1e-30)))
    x_u = -((((((c1 * qu + c2) * qu + c3) * qu + c4) * qu + c5) * qu + c6) /
            ((((d1 * qu + d2) * qu + d3) * qu + d4) * qu + 1.0))

    return jnp.where(p < p_low, x_l, jnp.where(p > p_high, x_u, x_c))


def _random_baseline_kernel(seed_ref, mu_ref, sigma_ref, out_ref):
    rows, lanes = out_ref.shape
    pid = pl.program_id(0)

    # Hoist SMEM scalars into locals.
    mu = mu_ref[0]
    sigma = sigma_ref[0]
    seed_u = seed_ref[0].astype(jnp.uint32)

    # Unique global element index per output element (includes the block id,
    # so every grid block / TensorCore produces an independent stream).
    row_ids = jax.lax.broadcasted_iota(jnp.int32, (rows, lanes), 0)
    lane_ids = jax.lax.broadcasted_iota(jnp.int32, (rows, lanes), 1)
    idx = (pid * rows + row_ids) * lanes + lane_ids
    ctr = idx.astype(jnp.uint32)

    # Counter-based hash RNG keyed by the seed.
    bits = _hash_u32(ctr ^ (seed_u * jnp.uint32(0x9E3779B9)))
    bits = _hash_u32(bits + jnp.uint32(0x6A09E667))

    # Uniform in (0, 1) from the top 23 bits (never exactly 0 or 1 in f32).
    u = ((bits >> 9).astype(jnp.float32) + 0.5) * jnp.float32(1.0 / 8388608.0)

    # N(0,1) -> N(mu, sigma).
    z = _inv_norm_cdf(u)
    out_ref[...] = mu + sigma * z


def _forward_pallas(batch, mu, sigma, seed):
    # Minimal dense slab: rows needed to cover `batch` samples at 128 lanes,
    # rounded up to the (8, 128) tile granularity.  Large batches tile over a
    # 1-D grid of (_MAX_BLOCK_ROWS, 128) blocks.
    rows_needed = pl.cdiv(batch, _LANES)
    if rows_needed <= _MAX_BLOCK_ROWS:
        block_rows = max(8, ((rows_needed + 7) // 8) * 8)
        n_blocks = 1
    else:
        block_rows = _MAX_BLOCK_ROWS
        n_blocks = pl.cdiv(rows_needed, block_rows)
    rows = n_blocks * block_rows

    seed_arr = jnp.asarray([seed], dtype=jnp.int32)
    mu_arr = jnp.asarray([mu], dtype=jnp.float32)
    sigma_arr = jnp.asarray([sigma], dtype=jnp.float32)

    out = pl.pallas_call(
        _random_baseline_kernel,
        out_shape=jax.ShapeDtypeStruct((rows, _LANES), jnp.float32),
        grid=(n_blocks,),
        in_specs=[
            pl.BlockSpec(memory_space=pltpu.MemorySpace.SMEM),  # seed
            pl.BlockSpec(memory_space=pltpu.MemorySpace.SMEM),  # mu
            pl.BlockSpec(memory_space=pltpu.MemorySpace.SMEM),  # sigma
        ],
        out_specs=pl.BlockSpec((block_rows, _LANES), lambda i: (i, 0)),
        compiler_params=pltpu.CompilerParams(
            dimension_semantics=("parallel",)),
    )(seed_arr, mu_arr, sigma_arr)

    # Glue: densely packed slab -> (batch, 1), matching
    # torch.FloatTensor(x).unsqueeze(-1).
    return out.reshape(-1)[:batch].reshape(batch, 1)


def random_continuous_baseline_forward(x, mu, sigma, seed, *, min_pallas_batch=4096):
    """Equivalent of RandomContinuousBaseline.forward.

    Args:
      x:     array whose leading dim is the batch size (contents unused).
      mu:    scalar — mean of y_train.
      sigma: scalar — sample stdev of y_train.
      seed:  int — PRNG seed (advance it per call to mimic numpy's behaviour).
      min_pallas_batch: batches smaller than this use plain jax.random.normal
        (launch overhead of a custom call dwarfs the RNG at tiny B); set to 0
        to force the Pallas kernel.

    Returns:
      float32 array of shape (batch_size, 1) ~ N(mu, sigma).
    """
    batch = int(x.shape[0])
    if batch == 0:
        return jnp.zeros((0, 1), dtype=jnp.float32)
    if batch < min_pallas_batch:
        key = jax.random.PRNGKey(seed)
        z = jax.random.normal(key, (batch, 1), dtype=jnp.float32)
        return jnp.float32(mu) + jnp.float32(sigma) * z
    return _forward_pallas(batch, mu, sigma, seed)


if __name__ == "__main__":
    key = jax.random.PRNGKey(0)
    kx, ky = jax.random.split(key)

    # Example input, NCHW like the PyTorch module would receive.
    x = jax.random.normal(kx, (2, 4, 16, 16), dtype=jnp.float32)

    # Deterministic synthetic y_train; __init__ computes mean / stdev of it.
    y_train = jax.random.normal(ky, (64,), dtype=jnp.float32) * 2.0 + 3.0
    mu = float(jnp.mean(y_train))
    sigma = float(jnp.std(y_train, ddof=1))  # statistics.stdev == ddof=1

    # Force the Pallas path so the kernel itself is exercised at small batch.
    out = random_continuous_baseline_forward(x, mu, sigma, seed=0,
                                             min_pallas_batch=0)
    out = jax.block_until_ready(out)
    assert out.shape == (x.shape[0], 1), out.shape
    assert out.dtype == jnp.float32, out.dtype
    assert bool(jnp.all(jnp.isfinite(out))), "non-finite samples"

    # Distributional sanity check on a larger batch (single grid block).
    x_big = jnp.zeros((4096, 1), dtype=jnp.float32)
    out_big = random_continuous_baseline_forward(x_big, mu, sigma, seed=1,
                                                 min_pallas_batch=0)
    out_big = jax.block_until_ready(out_big)
    assert out_big.shape == (4096, 1)
    emp_mu = float(jnp.mean(out_big))
    emp_sd = float(jnp.std(out_big))
    assert abs(emp_mu - mu) < 0.25 * sigma, (emp_mu, mu, sigma)
    assert 0.75 * sigma < emp_sd < 1.25 * sigma, (emp_sd, sigma)

    # Multi-block path sanity check (exercises the 1-D grid / pid-keyed streams).
    x_huge = jnp.zeros((_MAX_BLOCK_ROWS * _LANES * 2 + 7, 1), dtype=jnp.float32)
    out_huge = random_continuous_baseline_forward(x_huge, mu, sigma, seed=2,
                                                  min_pallas_batch=0)
    out_huge = jax.block_until_ready(out_huge)
    assert out_huge.shape == (x_huge.shape[0], 1)
    assert bool(jnp.all(jnp.isfinite(out_huge))), "non-finite samples (multi-block)"

    print("KERNEL_OK")
</pallas_src>

<mosaic_0001>
module attributes {stable_mosaic.version = 11 : i64} {
  func.func @_random_baseline_kernel(%arg0: i32, %arg1: memref<1xi32, #tpu.memory_space<smem>>, %arg2: memref<1xf32, #tpu.memory_space<smem>>, %arg3: memref<1xf32, #tpu.memory_space<smem>>, %arg4: memref<8x128xf32, #tpu.memory_space<vmem>>) attributes {dimension_semantics = [#tpu.dimension_semantics<parallel>], iteration_bounds = array<i64: 1>, scalar_prefetch = 0 : i64, scratch_operands = 0 : i64, tpu.core_type = #tpu.core_type<tc>, window_params = [{transform_indices = @transform_0, window_bounds = array<i64: 1>}, {transform_indices = @transform_1, window_bounds = array<i64: 1>}, {transform_indices = @transform_2, window_bounds = array<i64: 1>}, {transform_indices = @transform_3, window_bounds = array<i64: 8, 128>}]} {
    %c0 = arith.constant 0 : index
    %0 = memref.load %arg2[%c0] : memref<1xf32, #tpu.memory_space<smem>>
    %c0_0 = arith.constant 0 : index
    %1 = memref.load %arg3[%c0_0] : memref<1xf32, #tpu.memory_space<smem>>
    %c0_1 = arith.constant 0 : index
    %2 = memref.load %arg1[%c0_1] : memref<1xi32, #tpu.memory_space<smem>>
    %3 = tpu.iota {dimensions = array<i32: 0>} : vector<8x128xi32>
    %4 = tpu.iota {dimensions = array<i32: 1>} : vector<8x128xi32>
    %c8_i32 = arith.constant 8 : i32
    %5 = arith.muli %arg0, %c8_i32 : i32
    %6 = vector.broadcast %5 : i32 to vector<8x128xi32>
    %7 = arith.addi %6, %3 : vector<8x128xi32>
    %c128_i32 = arith.constant 128 : i32
    %8 = vector.broadcast %c128_i32 : i32 to vector<8x128xi32>
    %9 = arith.muli %7, %8 : vector<8x128xi32>
    %10 = arith.addi %9, %4 : vector<8x128xi32>
    %c-1640531527_i32 = arith.constant -1640531527 : i32
    %11 = arith.muli %2, %c-1640531527_i32 : i32
    %12 = vector.broadcast %11 : i32 to vector<8x128xi32>
    %13 = arith.xori %10, %12 : vector<8x128xi32>
    %c16_i32 = arith.constant 16 : i32
    %14 = vector.broadcast %c16_i32 : i32 to vector<8x128xi32>
    %15 = arith.shrui %13, %14 : vector<8x128xi32>
    %16 = arith.xori %13, %15 : vector<8x128xi32>
    %c2146121005_i32 = arith.constant 2146121005 : i32
    %17 = vector.broadcast %c2146121005_i32 : i32 to vector<8x128xi32>
    %18 = arith.muli %16, %17 : vector<8x128xi32>
    %c15_i32 = arith.constant 15 : i32
    %19 = vector.broadcast %c15_i32 : i32 to vector<8x128xi32>
    %20 = arith.shrui %18, %19 : vector<8x128xi32>
    %21 = arith.xori %18, %20 : vector<8x128xi32>
    %c-2073254261_i32 = arith.constant -2073254261 : i32
    %22 = vector.broadcast %c-2073254261_i32 : i32 to vector<8x128xi32>
    %23 = arith.muli %21, %22 : vector<8x128xi32>
    %c16_i32_2 = arith.constant 16 : i32
    %24 = vector.broadcast %c16_i32_2 : i32 to vector<8x128xi32>
    %25 = arith.shrui %23, %24 : vector<8x128xi32>
    %26 = arith.xori %23, %25 : vector<8x128xi32>
    %c1779033703_i32 = arith.constant 1779033703 : i32
    %27 = vector.broadcast %c1779033703_i32 : i32 to vector<8x128xi32>
    %28 = arith.addi %26, %27 : vector<8x128xi32>
    %c16_i32_3 = arith.constant 16 : i32
    %29 = vector.broadcast %c16_i32_3 : i32 to vector<8x128xi32>
    %30 = arith.shrui %28, %29 : vector<8x128xi32>
    %31 = arith.xori %28, %30 : vector<8x128xi32>
    %c2146121005_i32_4 = arith.constant 2146121005 : i32
    %32 = vector.broadcast %c2146121005_i32_4 : i32 to vector<8x128xi32>
    %33 = arith.muli %31, %32 : vector<8x128xi32>
    %c15_i32_5 = arith.constant 15 : i32
    %34 = vector.broadcast %c15_i32_5 : i32 to vector<8x128xi32>
    %35 = arith.shrui %33, %34 : vector<8x128xi32>
    %36 = arith.xori %33, %35 : vector<8x128xi32>
    %c-2073254261_i32_6 = arith.constant -2073254261 : i32
    %37 = vector.broadcast %c-2073254261_i32_6 : i32 to vector<8x128xi32>
    %38 = arith.muli %36, %37 : vector<8x128xi32>
    %c16_i32_7 = arith.constant 16 : i32
    %39 = vector.broadcast %c16_i32_7 : i32 to vector<8x128xi32>
    %40 = arith.shrui %38, %39 : vector<8x128xi32>
    %41 = arith.xori %38, %40 : vector<8x128xi32>
    %c9_i32 = arith.constant 9 : i32
    %42 = vector.broadcast %c9_i32 : i32 to vector<8x128xi32>
    %43 = arith.shrui %41, %42 : vector<8x128xi32>
    %44 = arith.uitofp %43 : vector<8x128xi32> to vector<8x128xf32>
    %cst = arith.constant 5.000000e-01 : f32
    %45 = vector.broadcast %cst : f32 to vector<8x128xf32>
    %46 = arith.addf %44, %45 : vector<8x128xf32>
    %cst_8 = arith.constant 1.1920929E-7 : f32
    %47 = vector.broadcast %cst_8 : f32 to vector<8x128xf32>
    %48 = arith.mulf %46, %47 : vector<8x128xf32>
    %cst_9 = arith.constant 5.000000e-01 : f32
    %49 = vector.broadcast %cst_9 : f32 to vector<8x128xf32>
    %50 = arith.subf %48, %49 : vector<8x128xf32>
    %51 = arith.mulf %50, %50 : vector<8x128xf32>
    %cst_10 = arith.constant -39.6968307 : f32
    %52 = vector.broadcast %cst_10 : f32 to vector<8x128xf32>
    %53 = arith.mulf %52, %51 : vector<8x128xf32>
    %cst_11 = arith.constant 220.946106 : f32
    %54 = vector.broadcast %cst_11 : f32 to vector<8x128xf32>
    %55 = arith.addf %53, %54 : vector<8x128xf32>
    %56 = arith.mulf %55, %51 : vector<8x128xf32>
    %cst_12 = arith.constant -275.928497 : f32
    %57 = vector.broadcast %cst_12 : f32 to vector<8x128xf32>
    %58 = arith.addf %56, %57 : vector<8x128xf32>
    %59 = arith.mulf %58, %51 : vector<8x128xf32>
    %cst_13 = arith.constant 138.357758 : f32
    %60 = vector.broadcast %cst_13 : f32 to vector<8x128xf32>
    %61 = arith.addf %59, %60 : vector<8x128xf32>
    %62 = arith.mulf %61, %51 : vector<8x128xf32>
    %cst_14 = arith.constant -30.6647987 : f32
    %63 = vector.broadcast %cst_14 : f32 to vector<8x128xf32>
    %64 = arith.addf %62, %63 : vector<8x128xf32>
    %65 = arith.mulf %64, %51 : vector<8x128xf32>
    %cst_15 = arith.constant 2.50662827 : f32
    %66 = vector.broadcast %cst_15 : f32 to vector<8x128xf32>
    %67 = arith.addf %65, %66 : vector<8x128xf32>
    %68 = arith.mulf %67, %50 : vector<8x128xf32>
    %cst_16 = arith.constant -54.4760971 : f32
    %69 = vector.broadcast %cst_16 : f32 to vector<8x128xf32>
    %70 = arith.mulf %69, %51 : vector<8x128xf32>
    %cst_17 = arith.constant 161.585831 : f32
    %71 = vector.broadcast %cst_17 : f32 to vector<8x128xf32>
    %72 = arith.addf %70, %71 : vector<8x128xf32>
    %73 = arith.mulf %72, %51 : vector<8x128xf32>
    %cst_18 = arith.constant -155.698975 : f32
    %74 = vector.broadcast %cst_18 : f32 to vector<8x128xf32>
    %75 = arith.addf %73, %74 : vector<8x128xf32>
    %76 = arith.mulf %75, %51 : vector<8x128xf32>
    %cst_19 = arith.constant 66.8013153 : f32
    %77 = vector.broadcast %cst_19 : f32 to vector<8x128xf32>
    %78 = arith.addf %76, %77 : vector<8x128xf32>
    %79 = arith.mulf %78, %51 : vector<8x128xf32>
    %cst_20 = arith.constant -13.2806816 : f32
    %80 = vector.broadcast %cst_20 : f32 to vector<8x128xf32>
    %81 = arith.addf %79, %80 : vector<8x128xf32>
    %82 = arith.mulf %81, %51 : vector<8x128xf32>
    %cst_21 = arith.constant 1.000000e+00 : f32
    %83 = vector.broadcast %cst_21 : f32 to vector<8x128xf32>
    %84 = arith.addf %82, %83 : vector<8x128xf32>
    %85 = arith.divf %68, %84 : vector<8x128xf32>
    %cst_22 = arith.constant 1.000000e-30 : f32
    %86 = vector.broadcast %cst_22 : f32 to vector<8x128xf32>
    %87 = arith.maximumf %48, %86 : vector<8x128xf32>
    %88 = math.log %87 : vector<8x128xf32>
    %cst_23 = arith.constant -2.000000e+00 : f32
    %89 = vector.broadcast %cst_23 : f32 to vector<8x128xf32>
    %90 = arith.mulf %89, %88 : vector<8x128xf32>
    %91 = math.sqrt %90 : vector<8x128xf32>
    %cst_24 = arith.constant -0.0077848942 : f32
    %92 = vector.broadcast %cst_24 : f32 to vector<8x128xf32>
    %93 = arith.mulf %92, %91 : vector<8x128xf32>
    %cst_25 = arith.constant -0.322396457 : f32
    %94 = vector.broadcast %cst_25 : f32 to vector<8x128xf32>
    %95 = arith.addf %93, %94 : vector<8x128xf32>
    %96 = arith.mulf %95, %91 : vector<8x128xf32>
    %cst_26 = arith.constant -2.40075827 : f32
    %97 = vector.broadcast %cst_26 : f32 to vector<8x128xf32>
    %98 = arith.addf %96, %97 : vector<8x128xf32>
    %99 = arith.mulf %98, %91 : vector<8x128xf32>
    %cst_27 = arith.constant -2.54973245 : f32
    %100 = vector.broadcast %cst_27 : f32 to vector<8x128xf32>
    %101 = arith.addf %99, %100 : vector<8x128xf32>
    %102 = arith.mulf %101, %91 : vector<8x128xf32>
    %cst_28 = arith.constant 4.37466431 : f32
    %103 = vector.broadcast %cst_28 : f32 to vector<8x128xf32>
    %104 = arith.addf %102, %103 : vector<8x128xf32>
    %105 = arith.mulf %104, %91 : vector<8x128xf32>
    %cst_29 = arith.constant 2.938164 : f32
    %106 = vector.broadcast %cst_29 : f32 to vector<8x128xf32>
    %107 = arith.addf %105, %106 : vector<8x128xf32>
    %cst_30 = arith.constant 0.00778469583 : f32
    %108 = vector.broadcast %cst_30 : f32 to vector<8x128xf32>
    %109 = arith.mulf %108, %91 : vector<8x128xf32>
    %cst_31 = arith.constant 0.322467119 : f32
    %110 = vector.broadcast %cst_31 : f32 to vector<8x128xf32>
    %111 = arith.addf %109, %110 : vector<8x128xf32>
    %112 = arith.mulf %111, %91 : vector<8x128xf32>
    %cst_32 = arith.constant 2.44513416 : f32
    %113 = vector.broadcast %cst_32 : f32 to vector<8x128xf32>
    %114 = arith.addf %112, %113 : vector<8x128xf32>
    %115 = arith.mulf %114, %91 : vector<8x128xf32>
    %cst_33 = arith.constant 3.7544086 : f32
    %116 = vector.broadcast %cst_33 : f32 to vector<8x128xf32>
    %117 = arith.addf %115, %116 : vector<8x128xf32>
    %118 = arith.mulf %117, %91 : vector<8x128xf32>
    %cst_34 = arith.constant 1.000000e+00 : f32
    %119 = vector.broadcast %cst_34 : f32 to vector<8x128xf32>
    %120 = arith.addf %118, %119 : vector<8x128xf32>
    %121 = arith.divf %107, %120 : vector<8x128xf32>
    %cst_35 = arith.constant 1.000000e+00 : f32
    %122 = vector.broadcast %cst_35 : f32 to vector<8x128xf32>
    %123 = arith.subf %122, %48 : vector<8x128xf32>
    %cst_36 = arith.constant 1.000000e-30 : f32
    %124 = vector.broadcast %cst_36 : f32 to vector<8x128xf32>
    %125 = arith.maximumf %123, %124 : vector<8x128xf32>
    %126 = math.log %125 : vector<8x128xf32>
    %cst_37 = arith.constant -2.000000e+00 : f32
    %127 = vector.broadcast %cst_37 : f32 to vector<8x128xf32>
    %128 = arith.mulf %127, %126 : vector<8x128xf32>
    %129 = math.sqrt %128 : vector<8x128xf32>
    %cst_38 = arith.constant -0.0077848942 : f32
    %130 = vector.broadcast %cst_38 : f32 to vector<8x128xf32>
    %131 = arith.mulf %130, %129 : vector<8x128xf32>
    %cst_39 = arith.constant -0.322396457 : f32
    %132 = vector.broadcast %cst_39 : f32 to vector<8x128xf32>
    %133 = arith.addf %131, %132 : vector<8x128xf32>
    %134 = arith.mulf %133, %129 : vector<8x128xf32>
    %cst_40 = arith.constant -2.40075827 : f32
    %135 = vector.broadcast %cst_40 : f32 to vector<8x128xf32>
    %136 = arith.addf %134, %135 : vector<8x128xf32>
    %137 = arith.mulf %136, %129 : vector<8x128xf32>
    %cst_41 = arith.constant -2.54973245 : f32
    %138 = vector.broadcast %cst_41 : f32 to vector<8x128xf32>
    %139 = arith.addf %137, %138 : vector<8x128xf32>
    %140 = arith.mulf %139, %129 : vector<8x128xf32>
    %cst_42 = arith.constant 4.37466431 : f32
    %141 = vector.broadcast %cst_42 : f32 to vector<8x128xf32>
    %142 = arith.addf %140, %141 : vector<8x128xf32>
    %143 = arith.mulf %142, %129 : vector<8x128xf32>
    %cst_43 = arith.constant 2.938164 : f32
    %144 = vector.broadcast %cst_43 : f32 to vector<8x128xf32>
    %145 = arith.addf %143, %144 : vector<8x128xf32>
    %cst_44 = arith.constant 0.00778469583 : f32
    %146 = vector.broadcast %cst_44 : f32 to vector<8x128xf32>
    %147 = arith.mulf %146, %129 : vector<8x128xf32>
    %cst_45 = arith.constant 0.322467119 : f32
    %148 = vector.broadcast %cst_45 : f32 to vector<8x128xf32>
    %149 = arith.addf %147, %148 : vector<8x128xf32>
    %150 = arith.mulf %149, %129 : vector<8x128xf32>
    %cst_46 = arith.constant 2.44513416 : f32
    %151 = vector.broadcast %cst_46 : f32 to vector<8x128xf32>
    %152 = arith.addf %150, %151 : vector<8x128xf32>
    %153 = arith.mulf %152, %129 : vector<8x128xf32>
    %cst_47 = arith.constant 3.7544086 : f32
    %154 = vector.broadcast %cst_47 : f32 to vector<8x128xf32>
    %155 = arith.addf %153, %154 : vector<8x128xf32>
    %156 = arith.mulf %155, %129 : vector<8x128xf32>
    %cst_48 = arith.constant 1.000000e+00 : f32
    %157 = vector.broadcast %cst_48 : f32 to vector<8x128xf32>
    %158 = arith.addf %156, %157 : vector<8x128xf32>
    %159 = arith.divf %145, %158 : vector<8x128xf32>
    %cst_49 = arith.constant 0.000000e+00 : f32
    %160 = vector.broadcast %cst_49 : f32 to vector<8x128xf32>
    %161 = arith.subf %160, %159 : vector<8x128xf32>
    %cst_50 = arith.constant 2.425000e-02 : f32
    %162 = vector.broadcast %cst_50 : f32 to vector<8x128xf32>
    %163 = arith.cmpf olt, %48, %162 : vector<8x128xf32>
    %cst_51 = arith.constant 9.757500e-01 : f32
    %164 = vector.broadcast %cst_51 : f32 to vector<8x128xf32>
    %165 = arith.cmpf ogt, %48, %164 : vector<8x128xf32>
    %166 = arith.select %165, %161, %85 : vector<8x128xi1>, vector<8x128xf32>
    %167 = arith.select %163, %121, %166 : vector<8x128xi1>, vector<8x128xf32>
    %168 = vector.broadcast %1 : f32 to vector<8x128xf32>
    %169 = arith.mulf %168, %167 : vector<8x128xf32>
    %170 = vector.broadcast %0 : f32 to vector<8x128xf32>
    %171 = arith.addf %170, %169 : vector<8x128xf32>
    %c0_52 = arith.constant 0 : index
    %c0_53 = arith.constant 0 : index
    %172 = vector.load %arg4[%c0_52, %c0_53] : memref<8x128xf32, #tpu.memory_space<vmem>>, vector<8x128xf32>
    tpu.vector_store %arg4[%c0_52, %c0_53], %171 {strides = array<i32>} : memref<8x128xf32, #tpu.memory_space<vmem>>, vector<8x128xf32>,
    return
  }
  func.func @transform_0(%arg0: i32) -> i32 {
    %c0_i32 = arith.constant 0 : i32
    %c0_i32_0 = arith.constant 0 : i32
    return %c0_i32 : i32
  }
  func.func @transform_1(%arg0: i32) -> i32 {
    %c0_i32 = arith.constant 0 : i32
    %c0_i32_0 = arith.constant 0 : i32
    return %c0_i32 : i32
  }
  func.func @transform_2(%arg0: i32) -> i32 {
    %c0_i32 = arith.constant 0 : i32
    %c0_i32_0 = arith.constant 0 : i32
    return %c0_i32 : i32
  }
  func.func @transform_3(%arg0: i32) -> (i32, i32) {
    %c0_i32 = arith.constant 0 : i32
    %c0_i32_0 = arith.constant 0 : i32
    return %arg0, %c0_i32 : i32, i32
  }
}

</mosaic_0001>

<llo_original>
// kernel: tpu_custom_call.1
$region0: #{tpu_custom_call.1}
  #allocation0 [shape = 'u32[]', space=smem, size = 0x4, offset = 0x4, fixed_abs, tag = 'smem constant byte address 0x4 - core index']
  #allocation1 [shape = 'u32[144,128]{1,0:T(1,128)}', space=vmem, size = 0x12000, scoped, tag = 'internal scratch']
  #allocation2 [shape = 's32[1]{0:T(128)S(6)}', space=smem, size = 0x200, scoped, tag = 'scoped memory for tpu_custom_call.1']
  #allocation3 [shape = 'f32[1]{0:T(128)S(6)}', space=smem, size = 0x200, scoped, tag = 'scoped memory for tpu_custom_call.1']
  #allocation4 [shape = 'f32[1]{0:T(128)S(6)}', space=smem, size = 0x200, scoped, tag = 'scoped memory for tpu_custom_call.1']
  %s0 = inlined_call_operand.<no memory space> [shape: s32[1], index: 0, kind: input, shape index: {}]
  %s1 = inlined_call_operand.<no memory space> [shape: f32[1], index: 1, kind: input, shape index: {}]
  %s2 = inlined_call_operand.<no memory space> [shape: f32[1], index: 2, kind: input, shape index: {}]
  %s3 = inlined_call_operand.hbm [shape: f32[8,128], index: 3, kind: output, shape index: {}]
  %s4 = sld [smem:[#allocation0]]
  $region22: #{tpu_custom_call.1} parent=0
    _
  %s6 = ssub.s32 1, %s4
  %s7 = scalar_select 0, %s6, %s4
  %8 = sst [smem:[#allocation2]] %s0
  %9 = sst [smem:[#allocation3]] %s1
  %10 = sst [smem:[#allocation4]] %s2
  $region1: #{tpu_custom_call.1} parent=0
    #allocation5 [shape = 'u8[4096]{0}', space=vmem, size = 0x1000, scoped, tag = 'output window, operand 0, single buffered']
    #allocation6 [shape = 's32[1]{0}', space=sflag, size = 0x4, scoped, tag = 'scoped memory for tpu_custom_call.1']
    %11 = vsyncpa [#allocation6], 0
    // Predicated region
    $region2: #{tpu_custom_call.1} parent=1 // pred_check
      _
    $region3: #{tpu_custom_call.1} parent=1 // pred_check_branch
      %13 = sbr.rel (0) target = $region5
    $region4: #{tpu_custom_call.1} parent=1 // pred_region
      _
    $region5: #{tpu_custom_call.1} parent=1 // pred_fallthru
      _
    // Predicated region
    $region6: #{tpu_custom_call.1} parent=1 // pred_check
      _
    $region7: #{tpu_custom_call.1} parent=1 // pred_check_branch
      %15 = sbr.rel (0) target = $region9
    $region8: #{tpu_custom_call.1} parent=1 // pred_region
      _
    $region9: #{tpu_custom_call.1} parent=1 // pred_fallthru
      _
    // Predicated region
    $region10: #{tpu_custom_call.1} parent=1 // pred_check
      _
    $region11: #{tpu_custom_call.1} parent=1 // pred_check_branch
      %17 = sbr.rel (0) target = $region13
    $region12: #{tpu_custom_call.1} parent=1 // pred_region
      _
    $region13: #{tpu_custom_call.1} parent=1 // pred_fallthru
      _
    %s18 = sld [smem:[#allocation3]]
    %s19 = sld [smem:[#allocation4]]
    %s20 = sld [smem:[#allocation2]]
    %v21 = vlaneseq
    %v22 = vshrl.u32 %v21, 7
    %v23 = vlaneseq
    %v24 = vand.u32 %v23, 127
    %s25 = smul.u32 0, 8
    %v26 = vstv %s25
    %v27 = vadd.s32 %v26, %v22
    %v28 = vmul.u32 %v27, 128
    %v29 = vadd.s32 %v28, %v24
    %s30 = smul.u32 %s20, 2654435769
    %v31 = vstv %s30
    %v32 = vxor.u32 %v29, %v31
    %v33 = vshrl.u32 %v32, 16
    %v34 = vxor.u32 %v32, %v33
    %v35 = vmul.u32 %v34, 2146121005
    %v36 = vshrl.u32 %v35, 15
    %v37 = vxor.u32 %v35, %v36
    %v38 = vmul.u32 %v37, 2221713035
    %v39 = vshrl.u32 %v38, 16
    %v40 = vxor.u32 %v38, %v39
    %v41 = vadd.s32 %v40, 1779033703
    %v42 = vshrl.u32 %v41, 16
    %v43 = vxor.u32 %v41, %v42
    %v44 = vmul.u32 %v43, 2146121005
    %v45 = vshrl.u32 %v44, 15
    %v46 = vxor.u32 %v44, %v45
    %v47 = vmul.u32 %v46, 2221713035
    %v48 = vshrl.u32 %v47, 16
    %v49 = vxor.u32 %v47, %v48
    %v50 = vshrl.u32 %v49, 9
    %v51 = vshrl.u32 %v50, 16
    %v52 = vand.u32 %v50, 65535
    %v53 = vcvt.s32.f32 %v51
    %v54 = vmul.f32 %v53, 65536.0
    %v55 = vcvt.s32.f32 %v52
    %v56 = vadd.f32 %v54, %v55
    %v57 = vadd.f32 %v56, 0.5
    %v58 = vmul.f32 %v57, 1.1920929e-07
    %v59 = vsub.f32 %v58, 0.5
    %v60 = vmul.f32 %v59, %v59
    %v61 = vmul.f32 %v60, -39.69683
    %v62 = vadd.f32 %v61, 220.9461
    %v63 = vmul.f32 %v62, %v60
    %v64 = vadd.f32 %v63, -275.9285
    %v65 = vmul.f32 %v64, %v60
    %v66 = vadd.f32 %v65, 138.35776
    %v67 = vmul.f32 %v66, %v60
    %v68 = vadd.f32 %v67, -30.664799
    %v69 = vmul.f32 %v68, %v60
    %v70 = vadd.f32 %v69, 2.5066283
    %v71 = vmul.f32 %v70, %v59
    %v72 = vmul.f32 %v60, -54.476097
    %v73 = vadd.f32 %v72, 161.58583
    %v74 = vmul.f32 %v73, %v60
    %v75 = vadd.f32 %v74, -155.69897
    %v76 = vmul.f32 %v75, %v60
    %v77 = vadd.f32 %v76, 66.801315
    %v78 = vmul.f32 %v77, %v60
    %v79 = vadd.f32 %v78, -13.280682
    %v80 = vmul.f32 %v79, %v60
    %v81 = vadd.f32 %v80, 1.0
    %v82 = vrcp.pop %v81
    %v83 = vmul.f32 %v71, %v82
    %v84 = vmax.f32 %v58, 1e-30
    %v85 = vlog2.pop %v84
    %v86 = vmul.f32 %v85, 0.6931472
    %v87 = vmul.f32 %v86, -2.0
    %v88 = vrsqrt.pop %v87
    %v89 = vmul.f32 %v87, %v88
    %vm90 = vcmp.eq.f32.partialorder %v87, inf
    %v91 = vsel %vm90, %v87, %v89
    %vm92 = vcmp.eq.f32.partialorder %v87, 0.0
    %v93 = vand.u32 %v87, 2147483648
    %v94 = vsel %vm92, %v93, %v91
    %v95 = vmul.f32 %v94, -0.007784894
    %v96 = vadd.f32 %v95, -0.32239646
    %v97 = vmul.f32 %v96, %v94
    %v98 = vadd.f32 %v97, -2.4007583
    %v99 = vmul.f32 %v98, %v94
    %v100 = vadd.f32 %v99, -2.5497324
    %v101 = vmul.f32 %v100, %v94
    %v102 = vadd.f32 %v101, 4.3746643
    %v103 = vmul.f32 %v102, %v94
    %v104 = vadd.f32 %v103, 2.938164
    %v105 = vmul.f32 %v94, 0.007784696
    %v106 = vadd.f32 %v105, 0.32246712
    %v107 = vmul.f32 %v106, %v94
    %v108 = vadd.f32 %v107, 2.4451342
    %v109 = vmul.f32 %v108, %v94
    %v110 = vadd.f32 %v109, 3.7544086
    %v111 = vmul.f32 %v110, %v94
    %v112 = vadd.f32 %v111, 1.0
    %v113 = vrcp.pop %v112
    %v114 = vmul.f32 %v104, %v113
    %v115 = vsub.f32 1.0, %v58
    %v116 = vmax.f32 %v115, 1e-30
    %v117 = vlog2.pop %v116
    %v118 = vmul.f32 %v117, 0.6931472
    %v119 = vmul.f32 %v118, -2.0
    %v120 = vrsqrt.pop %v119
    %v121 = vmul.f32 %v119, %v120
    %vm122 = vcmp.eq.f32.partialorder %v119, inf
    %v123 = vsel %vm122, %v119, %v121
    %vm124 = vcmp.eq.f32.partialorder %v119, 0.0
    %v125 = vand.u32 %v119, 2147483648
    %v126 = vsel %vm124, %v125, %v123
    %v127 = vmul.f32 %v126, -0.007784894
    %v128 = vadd.f32 %v127, -0.32239646
    %v129 = vmul.f32 %v128, %v126
    %v130 = vadd.f32 %v129, -2.4007583
    %v131 = vmul.f32 %v130, %v126
    %v132 = vadd.f32 %v131, -2.5497324
    %v133 = vmul.f32 %v132, %v126
    %v134 = vadd.f32 %v133, 4.3746643
    %v135 = vmul.f32 %v134, %v126
    %v136 = vadd.f32 %v135, 2.938164
    %v137 = vmul.f32 %v126, 0.007784696
    %v138 = vadd.f32 %v137, 0.32246712
    %v139 = vmul.f32 %v138, %v126
    %v140 = vadd.f32 %v139, 2.4451342
    %v141 = vmul.f32 %v140, %v126
    %v142 = vadd.f32 %v141, 3.7544086
    %v143 = vmul.f32 %v142, %v126
    %v144 = vadd.f32 %v143, 1.0
    %v145 = vrcp.pop %v144
    %v146 = vmul.f32 %v136, %v145
    %v147 = vsub.f32 0.0, %v146
    %vm148 = vcmp.lt.f32.partialorder %v58, 0.02425
    %vm149 = vcmp.gt.f32.partialorder %v58, 0.97575
    %v150 = vsel %vm149, %v147, %v83
    %v151 = vsel %vm148, %v114, %v150
    %v152 = vstv %s19
    %v153 = vmul.f32 %v152, %v151
    %v154 = vstv %s18
    %v155 = vadd.f32 %v154, %v153
    %156 = vst [vmem:[#allocation5] sm:$0xff] %v155
    // Predicated region
    $region14: #{tpu_custom_call.1} parent=1 // pred_check
      _
    $region15: #{tpu_custom_call.1} parent=1 // pred_check_branch
      %158 = sbr.rel (0) target = $region17
    $region16: #{tpu_custom_call.1} parent=1 // pred_region
      %s160 = ssub.s32 128, 128
      %161 = vsyncadd [#allocation6], %s160
      %s163 = sshll.u32 [#allocation5], 4
      %s164 = int_to_ptr.vmem [resolvable:$true] %s163
      %166 = dma.vmem_to_hbm [thread:$0]  %s164, 128, %s3, [#allocation6]
    $region17: #{tpu_custom_call.1} parent=1 // pred_fallthru
      _
    // Predicated region
    $region18: #{tpu_custom_call.1} parent=1 // pred_check
      _
    $region19: #{tpu_custom_call.1} parent=1 // pred_check_branch
      %168 = sbr.rel (0) target = $region21
    $region20: #{tpu_custom_call.1} parent=1 // pred_region
      %169 = dma.done [#allocation6], 128
    $region21: #{tpu_custom_call.1} parent=1 // pred_fallthru
      _
    %170 = vsyncpa [#allocation6], 1

</llo_original>
